<compile_context>
chip_gen: v7x
topology: tpu7x:2x2x1
jax: 0.10.0
libtpu: 0.0.40
codegen_flags: <defaults>
</compile_context>

<pallas_src>
import jax
import jax.numpy as jnp
from jax.experimental import pallas as pl
from jax.experimental.pallas import tpu as pltpu


def gap_conv1x1_kernel(x_ref, w_ref, b_ref, o_ref):
    # x_ref: (1, Cin, HW)  -- native NCHW layout, spatial dims flattened
    # w_ref: (Cout, Cin)   -- native Conv2d weight (1x1 taps squeezed)
    # b_ref: (Cout, 1)
    # o_ref: (1, Cout, 1)
    x = x_ref[0]                                   # (Cin, HW)
    hw = x.shape[1]

    # Single MXU contraction over Cin.  Intermediate (Cout, HW) is only a
    # handful of vregs (no (Cin,1) column -> no spill, no 1-lane weight load).
    a = jnp.dot(w_ref[...], x, preferred_element_type=jnp.float32)  # (Cout, HW)

    # Spatial mean as a lane-reduce on the VPU/XLU (separate slot from MXU),
    # with the 1/HW scale folded in; then bias.
    y = jnp.sum(a, axis=-1, keepdims=True) * (1.0 / hw) + b_ref[...]  # (Cout, 1)
    o_ref[0] = y.astype(o_ref.dtype)


def mean_conv2d(x_nchw, weight_oihw, bias):
    """x_nchw: (N, Cin, H, W); weight_oihw: (Cout, Cin, 1, 1); bias: (Cout,)."""
    n, c_in, h, w = x_nchw.shape
    c_out = weight_oihw.shape[0]
    hw = h * w

    # Copy-free views of the native layouts (no HBM transpose passes).
    x_flat = x_nchw.reshape(n, c_in, hw)          # (N, Cin, HW)
    w_2d = weight_oihw.reshape(c_out, c_in)       # (Cout, Cin)
    b_2d = bias.reshape(c_out, 1)                 # (Cout, 1)

    flops = n * (2 * c_out * c_in * hw + 2 * c_out * hw + 2 * c_out)
    bytes_accessed = 4 * (n * c_in * hw + c_out * c_in + c_out + n * c_out)

    out = pl.pallas_call(
        gap_conv1x1_kernel,
        out_shape=jax.ShapeDtypeStruct((n, c_out, 1), x_nchw.dtype),
        grid_spec=pltpu.PrefetchScalarGridSpec(
            num_scalar_prefetch=0,
            grid=(n,),
            in_specs=[
                pl.BlockSpec((1, c_in, hw), lambda i: (i, 0, 0)),
                pl.BlockSpec((c_out, c_in), lambda i: (0, 0)),
                pl.BlockSpec((c_out, 1), lambda i: (0, 0)),
            ],
            out_specs=pl.BlockSpec((1, c_out, 1), lambda i: (i, 0, 0)),
        ),
        compiler_params=pltpu.CompilerParams(
            dimension_semantics=("parallel",),
        ),
        cost_estimate=pl.CostEstimate(
            flops=flops, transcendentals=0, bytes_accessed=bytes_accessed),
    )(x_flat, w_2d, b_2d)

    # (N, Cout, 1) -> (N, Cout, 1, 1): matches mean(keepdim=True) + 1x1 conv.
    return out.reshape(n, c_out, 1, 1)


def reference(x_nchw, weight_oihw, bias):
    m = jnp.mean(x_nchw, axis=(2, 3), keepdims=True)            # (N, Cin, 1, 1)
    w = weight_oihw.reshape(weight_oihw.shape[0], -1)            # (Cout, Cin)
    y = jnp.einsum("nc,oc->no", m[:, :, 0, 0], w,
                   precision=jax.lax.Precision.HIGHEST) + bias
    return y.reshape(x_nchw.shape[0], -1, 1, 1)


if __name__ == "__main__":
    key = jax.random.PRNGKey(0)
    k_x, k_w, k_b = jax.random.split(key, 3)

    # Shapes implied by the module: Conv2d(1200, 50, 1x1) on a (1,1200,14,14) input.
    N, C_IN, H, W = 1, 1200, 14, 14
    C_OUT = 50

    x = jax.random.normal(k_x, (N, C_IN, H, W), dtype=jnp.float32)
    # deterministic Conv2d-style init (uniform in +/- 1/sqrt(fan_in))
    fan_in = C_IN * 1 * 1
    bound = 1.0 / (fan_in ** 0.5)
    weight = jax.random.uniform(
        k_w, (C_OUT, C_IN, 1, 1), dtype=jnp.float32, minval=-bound, maxval=bound
    )
    bias = jax.random.uniform(
        k_b, (C_OUT,), dtype=jnp.float32, minval=-bound, maxval=bound
    )

    y = mean_conv2d(x, weight, bias)
    jax.block_until_ready(y)

    y_ref = reference(x, weight, bias)
    assert y.shape == (N, C_OUT, 1, 1), y.shape
    assert jnp.allclose(y, y_ref, atol=1e-4, rtol=1e-4), "mismatch vs reference"

    print("KERNEL_OK")
</pallas_src>

<mosaic_0001>
module attributes {stable_mosaic.version = 11 : i64} {
  func.func @gap_conv1x1_kernel(%arg0: i32, %arg1: memref<1x1200x196xf32, #tpu.memory_space<vmem>>, %arg2: memref<50x1200xf32, #tpu.memory_space<vmem>>, %arg3: memref<50x1xf32, #tpu.memory_space<vmem>>, %arg4: memref<1x50x1xf32, #tpu.memory_space<vmem>>) attributes {dimension_semantics = [#tpu.dimension_semantics<parallel>], iteration_bounds = array<i64: 1>, scalar_prefetch = 0 : i64, scratch_operands = 0 : i64, tpu.core_type = #tpu.core_type<tc>, window_params = [{transform_indices = @transform_0, window_bounds = array<i64: 1, 1200, 196>}, {pipeline_mode = #tpu.pipeline_mode<synchronous>, transform_indices = @transform_1, window_bounds = array<i64: 50, 1200>}, {pipeline_mode = #tpu.pipeline_mode<synchronous>, transform_indices = @transform_2, window_bounds = array<i64: 50, 1>}, {transform_indices = @transform_3, window_bounds = array<i64: 1, 50, 1>}]} {
    %c0 = arith.constant 0 : index
    %c0_0 = arith.constant 0 : index
    %c0_1 = arith.constant 0 : index
    %0 = vector.load %arg1[%c0, %c0_0, %c0_1] : memref<1x1200x196xf32, #tpu.memory_space<vmem>>, vector<1x1200x196xf32>
    %1 = vector.shape_cast %0 : vector<1x1200x196xf32> to vector<1200x196xf32>
    %c0_2 = arith.constant 0 : index
    %c0_3 = arith.constant 0 : index
    %2 = vector.load %arg2[%c0_2, %c0_3] : memref<50x1200xf32, #tpu.memory_space<vmem>>, vector<50x1200xf32>
    %cst = arith.constant dense<0.000000e+00> : vector<50x196xf32>
    %3 = tpu.matmul %2, %1, %cst {dimension_numbers = #tpu.dot_dimension_numbers<[1], [0], [0], [1], [0, 0, 1, 1], [], []>} : vector<50x1200xf32>, vector<1200x196xf32>, vector<50x196xf32> -> vector<50x196xf32>
    %cst_4 = arith.constant dense<0.000000e+00> : vector<50xf32>
    %4 = vector.multi_reduction <add>, %3, %cst_4 [1] : vector<50x196xf32> to vector<50xf32>
    %5 = vector.shape_cast %4 : vector<50xf32> to vector<50x1xf32>
    %cst_5 = arith.constant 0.00510204071 : f32
    %6 = vector.broadcast %cst_5 : f32 to vector<50x1xf32>
    %7 = arith.mulf %5, %6 : vector<50x1xf32>
    %c0_6 = arith.constant 0 : index
    %c0_7 = arith.constant 0 : index
    %8 = vector.load %arg3[%c0_6, %c0_7] : memref<50x1xf32, #tpu.memory_space<vmem>>, vector<50x1xf32>
    %9 = arith.addf %7, %8 : vector<50x1xf32>
    %c0_8 = arith.constant 0 : index
    %c0_9 = arith.constant 0 : index
    %c0_10 = arith.constant 0 : index
    %10 = vector.load %arg4[%c0_8, %c0_9, %c0_10] : memref<1x50x1xf32, #tpu.memory_space<vmem>>, vector<1x50x1xf32>
    %11 = vector.shape_cast %10 : vector<1x50x1xf32> to vector<50x1xf32>
    %12 = vector.shape_cast %9 : vector<50x1xf32> to vector<1x50x1xf32>
    tpu.vector_store %arg4[%c0_8, %c0_9, %c0_10], %12 {strides = array<i32>} : memref<1x50x1xf32, #tpu.memory_space<vmem>>, vector<1x50x1xf32>,
    return
  }
  func.func @transform_0(%arg0: i32) -> (i32, i32, i32) {
    %c0_i32 = arith.constant 0 : i32
    %c0_i32_0 = arith.constant 0 : i32
    %c0_i32_1 = arith.constant 0 : i32
    return %arg0, %c0_i32, %c0_i32_0 : i32, i32, i32
  }
  func.func @transform_1(%arg0: i32) -> (i32, i32) {
    %c0_i32 = arith.constant 0 : i32
    %c0_i32_0 = arith.constant 0 : i32
    %c0_i32_1 = arith.constant 0 : i32
    return %c0_i32, %c0_i32_0 : i32, i32
  }
  func.func @transform_2(%arg0: i32) -> (i32, i32) {
    %c0_i32 = arith.constant 0 : i32
    %c0_i32_0 = arith.constant 0 : i32
    %c0_i32_1 = arith.constant 0 : i32
    return %c0_i32, %c0_i32_0 : i32, i32
  }
  func.func @transform_3(%arg0: i32) -> (i32, i32, i32) {
    %c0_i32 = arith.constant 0 : i32
    %c0_i32_0 = arith.constant 0 : i32
    %c0_i32_1 = arith.constant 0 : i32
    return %arg0, %c0_i32, %c0_i32_0 : i32, i32, i32
  }
}

</mosaic_0001>

<llo_original>
// kernel: tpu_custom_call.1
$region0: #{tpu_custom_call.1}
  #allocation0 [shape = 'u32[]', space=smem, size = 0x4, offset = 0x4, fixed_abs, tag = 'smem constant byte address 0x4 - core index']
  #allocation1 [shape = 'u32[144,128]{1,0:T(1,128)}', space=vmem, size = 0x12000, scoped, tag = 'internal scratch']
  %s0 = inlined_call_operand.vmem [shape: f32[1,1200,196], index: 0, kind: input, shape index: {}]
  %s1 = inlined_call_operand.vmem [shape: f32[50,1200], index: 1, kind: input, shape index: {}]
  %s2 = inlined_call_operand.vmem [shape: f32[50,1], index: 2, kind: input, shape index: {}]
  %s3 = inlined_call_operand.vmem [shape: f32[1,50,1], index: 3, kind: output, shape index: {}]
  %s4 = sld [smem:[#allocation0]]
  $region22: #{tpu_custom_call.1} parent=0
    _
  %s6 = ssub.s32 1, %s4
  %s7 = scalar_select 0, %s6, %s4
  // Predicated region
  $region2: #{tpu_custom_call.1} parent=0 // pred_check
    _
  $region3: #{tpu_custom_call.1} parent=0 // pred_check_branch
    %9 = sbr.rel (0) target = $region5
  $region4: #{tpu_custom_call.1} parent=0 // pred_region
    _
  $region5: #{tpu_custom_call.1} parent=0 // pred_fallthru
    _
  // Predicated region
  $region6: #{tpu_custom_call.1} parent=0 // pred_check
    _
  $region7: #{tpu_custom_call.1} parent=0 // pred_check_branch
    %11 = sbr.rel (0) target = $region9
  $region8: #{tpu_custom_call.1} parent=0 // pred_region
    _
  $region9: #{tpu_custom_call.1} parent=0 // pred_fallthru
    _
  // Predicated region
  $region10: #{tpu_custom_call.1} parent=0 // pred_check
    _
  $region11: #{tpu_custom_call.1} parent=0 // pred_check_branch
    %13 = sbr.rel (0) target = $region13
  $region12: #{tpu_custom_call.1} parent=0 // pred_region
    _
  $region13: #{tpu_custom_call.1} parent=0 // pred_fallthru
    _
  %v14 = vld [vmem:[%s0] sm:$0xff]
  %v15 = vld [vmem:[%s0 + $0x8] sm:$0xff]
  %v16 = vld [vmem:[%s0 + $0x10] sm:$0xff]
  %v17 = vld [vmem:[%s0 + $0x18] sm:$0xff]
  %v18 = vld [vmem:[%s0 + $0x20] sm:$0xff]
  %v19 = vld [vmem:[%s0 + $0x28] sm:$0xff]
  %v20 = vld [vmem:[%s0 + $0x30] sm:$0xff]
  %v21 = vld [vmem:[%s0 + $0x38] sm:$0xff]
  %v22 = vld [vmem:[%s0 + $0x40] sm:$0xff]
  %v23 = vld [vmem:[%s0 + $0x48] sm:$0xff]
  %v24 = vld [vmem:[%s0 + $0x50] sm:$0xff]
  %v25 = vld [vmem:[%s0 + $0x58] sm:$0xff]
  %v26 = vld [vmem:[%s0 + $0x60] sm:$0xff]
  %v27 = vld [vmem:[%s0 + $0x68] sm:$0xff]
  %v28 = vld [vmem:[%s0 + $0x70] sm:$0xff]
  %v29 = vld [vmem:[%s0 + $0x78] sm:$0xff]
  %v30 = vld [vmem:[%s0 + $0x80] sm:$0xff]
  %v31 = vld [vmem:[%s0 + $0x88] sm:$0xff]
  %v32 = vld [vmem:[%s0 + $0x90] sm:$0xff]
  %v33 = vld [vmem:[%s0 + $0x98] sm:$0xff]
  %v34 = vld [vmem:[%s0 + $0xa0] sm:$0xff]
  %v35 = vld [vmem:[%s0 + $0xa8] sm:$0xff]
  %v36 = vld [vmem:[%s0 + $0xb0] sm:$0xff]
  %v37 = vld [vmem:[%s0 + $0xb8] sm:$0xff]
  %v38 = vld [vmem:[%s0 + $0xc0] sm:$0xff]
  %v39 = vld [vmem:[%s0 + $0xc8] sm:$0xff]
  %v40 = vld [vmem:[%s0 + $0xd0] sm:$0xff]
  %v41 = vld [vmem:[%s0 + $0xd8] sm:$0xff]
  %v42 = vld [vmem:[%s0 + $0xe0] sm:$0xff]
  %v43 = vld [vmem:[%s0 + $0xe8] sm:$0xff]
  %v44 = vld [vmem:[%s0 + $0xf0] sm:$0xff]
  %v45 = vld [vmem:[%s0 + $0xf8] sm:$0xff]
  %v46 = vld [vmem:[%s0 + $0x100] sm:$0xff]
  %v47 = vld [vmem:[%s0 + $0x108] sm:$0xff]
  %v48 = vld [vmem:[%s0 + $0x110] sm:$0xff]
  %v49 = vld [vmem:[%s0 + $0x118] sm:$0xff]
  %v50 = vld [vmem:[%s0 + $0x120] sm:$0xff]
  %v51 = vld [vmem:[%s0 + $0x128] sm:$0xff]
  %v52 = vld [vmem:[%s0 + $0x130] sm:$0xff]
  %v53 = vld [vmem:[%s0 + $0x138] sm:$0xff]
  %v54 = vld [vmem:[%s0 + $0x140] sm:$0xff]
  %v55 = vld [vmem:[%s0 + $0x148] sm:$0xff]
  %v56 = vld [vmem:[%s0 + $0x150] sm:$0xff]
  %v57 = vld [vmem:[%s0 + $0x158] sm:$0xff]
  %v58 = vld [vmem:[%s0 + $0x160] sm:$0xff]
  %v59 = vld [vmem:[%s0 + $0x168] sm:$0xff]
  %v60 = vld [vmem:[%s0 + $0x170] sm:$0xff]
  %v61 = vld [vmem:[%s0 + $0x178] sm:$0xff]
  %v62 = vld [vmem:[%s0 + $0x180] sm:$0xff]
  %v63 = vld [vmem:[%s0 + $0x188] sm:$0xff]
  %v64 = vld [vmem:[%s0 + $0x190] sm:$0xff]
  %v65 = vld [vmem:[%s0 + $0x198] sm:$0xff]
  %v66 = vld [vmem:[%s0 + $0x1a0] sm:$0xff]
  %v67 = vld [vmem:[%s0 + $0x1a8] sm:$0xff]
  %v68 = vld [vmem:[%s0 + $0x1b0] sm:$0xff]
  %v69 = vld [vmem:[%s0 + $0x1b8] sm:$0xff]
  %v70 = vld [vmem:[%s0 + $0x1c0] sm:$0xff]
  %v71 = vld [vmem:[%s0 + $0x1c8] sm:$0xff]
  %v72 = vld [vmem:[%s0 + $0x1d0] sm:$0xff]
  %v73 = vld [vmem:[%s0 + $0x1d8] sm:$0xff]
  %v74 = vld [vmem:[%s0 + $0x1e0] sm:$0xff]
  %v75 = vld [vmem:[%s0 + $0x1e8] sm:$0xff]
  %v76 = vld [vmem:[%s0 + $0x1f0] sm:$0xff]
  %v77 = vld [vmem:[%s0 + $0x1f8] sm:$0xff]
  %v78 = vld [vmem:[%s0 + $0x200] sm:$0xff]
  %v79 = vld [vmem:[%s0 + $0x208] sm:$0xff]
  %v80 = vld [vmem:[%s0 + $0x210] sm:$0xff]
  %v81 = vld [vmem:[%s0 + $0x218] sm:$0xff]
  %v82 = vld [vmem:[%s0 + $0x220] sm:$0xff]
  %v83 = vld [vmem:[%s0 + $0x228] sm:$0xff]
  %v84 = vld [vmem:[%s0 + $0x230] sm:$0xff]
  %v85 = vld [vmem:[%s0 + $0x238] sm:$0xff]
  %v86 = vld [vmem:[%s0 + $0x240] sm:$0xff]
  %v87 = vld [vmem:[%s0 + $0x248] sm:$0xff]
  %v88 = vld [vmem:[%s0 + $0x250] sm:$0xff]
  %v89 = vld [vmem:[%s0 + $0x258] sm:$0xff]
  %v90 = vld [vmem:[%s0 + $0x260] sm:$0xff]
  %v91 = vld [vmem:[%s0 + $0x268] sm:$0xff]
  %v92 = vld [vmem:[%s0 + $0x270] sm:$0xff]
  %v93 = vld [vmem:[%s0 + $0x278] sm:$0xff]
  %v94 = vld [vmem:[%s0 + $0x280] sm:$0xff]
  %v95 = vld [vmem:[%s0 + $0x288] sm:$0xff]
  %v96 = vld [vmem:[%s0 + $0x290] sm:$0xff]
  %v97 = vld [vmem:[%s0 + $0x298] sm:$0xff]
  %v98 = vld [vmem:[%s0 + $0x2a0] sm:$0xff]
  %v99 = vld [vmem:[%s0 + $0x2a8] sm:$0xff]
  %v100 = vld [vmem:[%s0 + $0x2b0] sm:$0xff]
  %v101 = vld [vmem:[%s0 + $0x2b8] sm:$0xff]
  %v102 = vld [vmem:[%s0 + $0x2c0] sm:$0xff]
  %v103 = vld [vmem:[%s0 + $0x2c8] sm:$0xff]
  %v104 = vld [vmem:[%s0 + $0x2d0] sm:$0xff]
  %v105 = vld [vmem:[%s0 + $0x2d8] sm:$0xff]
  %v106 = vld [vmem:[%s0 + $0x2e0] sm:$0xff]
  %v107 = vld [vmem:[%s0 + $0x2e8] sm:$0xff]
  %v108 = vld [vmem:[%s0 + $0x2f0] sm:$0xff]
  %v109 = vld [vmem:[%s0 + $0x2f8] sm:$0xff]
  %v110 = vld [vmem:[%s0 + $0x300] sm:$0xff]
  %v111 = vld [vmem:[%s0 + $0x308] sm:$0xff]
  %v112 = vld [vmem:[%s0 + $0x310] sm:$0xff]
  %v113 = vld [vmem:[%s0 + $0x318] sm:$0xff]
  %v114 = vld [vmem:[%s0 + $0x320] sm:$0xff]
  %v115 = vld [vmem:[%s0 + $0x328] sm:$0xff]
  %v116 = vld [vmem:[%s0 + $0x330] sm:$0xff]
  %v117 = vld [vmem:[%s0 + $0x338] sm:$0xff]
  %v118 = vld [vmem:[%s0 + $0x340] sm:$0xff]
  %v119 = vld [vmem:[%s0 + $0x348] sm:$0xff]
  %v120 = vld [vmem:[%s0 + $0x350] sm:$0xff]
  %v121 = vld [vmem:[%s0 + $0x358] sm:$0xff]
  %v122 = vld [vmem:[%s0 + $0x360] sm:$0xff]
  %v123 = vld [vmem:[%s0 + $0x368] sm:$0xff]
  %v124 = vld [vmem:[%s0 + $0x370] sm:$0xff]
  %v125 = vld [vmem:[%s0 + $0x378] sm:$0xff]
  %v126 = vld [vmem:[%s0 + $0x380] sm:$0xff]
  %v127 = vld [vmem:[%s0 + $0x388] sm:$0xff]
  %v128 = vld [vmem:[%s0 + $0x390] sm:$0xff]
  %v129 = vld [vmem:[%s0 + $0x398] sm:$0xff]
  %v130 = vld [vmem:[%s0 + $0x3a0] sm:$0xff]
  %v131 = vld [vmem:[%s0 + $0x3a8] sm:$0xff]
  %v132 = vld [vmem:[%s0 + $0x3b0] sm:$0xff]
  %v133 = vld [vmem:[%s0 + $0x3b8] sm:$0xff]
  %v134 = vld [vmem:[%s0 + $0x3c0] sm:$0xff]
  %v135 = vld [vmem:[%s0 + $0x3c8] sm:$0xff]
  %v136 = vld [vmem:[%s0 + $0x3d0] sm:$0xff]
  %v137 = vld [vmem:[%s0 + $0x3d8] sm:$0xff]
  %v138 = vld [vmem:[%s0 + $0x3e0] sm:$0xff]
  %v139 = vld [vmem:[%s0 + $0x3e8] sm:$0xff]
  %v140 = vld [vmem:[%s0 + $0x3f0] sm:$0xff]
  %v141 = vld [vmem:[%s0 + $0x3f8] sm:$0xff]
  %v142 = vld [vmem:[%s0 + $0x400] sm:$0xff]
  %v143 = vld [vmem:[%s0 + $0x408] sm:$0xff]
  %v144 = vld [vmem:[%s0 + $0x410] sm:$0xff]
  %v145 = vld [vmem:[%s0 + $0x418] sm:$0xff]
  %v146 = vld [vmem:[%s0 + $0x420] sm:$0xff]
  %v147 = vld [vmem:[%s0 + $0x428] sm:$0xff]
  %v148 = vld [vmem:[%s0 + $0x430] sm:$0xff]
  %v149 = vld [vmem:[%s0 + $0x438] sm:$0xff]
  %v150 = vld [vmem:[%s0 + $0x440] sm:$0xff]
  %v151 = vld [vmem:[%s0 + $0x448] sm:$0xff]
  %v152 = vld [vmem:[%s0 + $0x450] sm:$0xff]
  %v153 = vld [vmem:[%s0 + $0x458] sm:$0xff]
  %v154 = vld [vmem:[%s0 + $0x460] sm:$0xff]
  %v155 = vld [vmem:[%s0 + $0x468] sm:$0xff]
  %v156 = vld [vmem:[%s0 + $0x470] sm:$0xff]
  %v157 = vld [vmem:[%s0 + $0x478] sm:$0xff]
  %v158 = vld [vmem:[%s0 + $0x480] sm:$0xff]
  %v159 = vld [vmem:[%s0 + $0x488] sm:$0xff]
  %v160 = vld [vmem:[%s0 + $0x490] sm:$0xff]
  %v161 = vld [vmem:[%s0 + $0x498] sm:$0xff]
  %v162 = vld [vmem:[%s0 + $0x4a0] sm:$0xff]
  %v163 = vld [vmem:[%s0 + $0x4a8] sm:$0xff]
  %v164 = vld [vmem:[%s0 + $0x4b0] sm:$0xff]
  %v165 = vld [vmem:[%s0 + $0x4b8] sm:$0xff]
  %v166 = vld [vmem:[%s0 + $0x4c0] sm:$0xff]
  %v167 = vld [vmem:[%s0 + $0x4c8] sm:$0xff]
  %v168 = vld [vmem:[%s0 + $0x4d0] sm:$0xff]
  %v169 = vld [vmem:[%s0 + $0x4d8] sm:$0xff]
  %v170 = vld [vmem:[%s0 + $0x4e0] sm:$0xff]
  %v171 = vld [vmem:[%s0 + $0x4e8] sm:$0xff]
  %v172 = vld [vmem:[%s0 + $0x4f0] sm:$0xff]
  %v173 = vld [vmem:[%s0 + $0x4f8] sm:$0xff]
  %v174 = vld [vmem:[%s0 + $0x500] sm:$0xff]
  %v175 = vld [vmem:[%s0 + $0x508] sm:$0xff]
  %v176 = vld [vmem:[%s0 + $0x510] sm:$0xff]
  %v177 = vld [vmem:[%s0 + $0x518] sm:$0xff]
  %v178 = vld [vmem:[%s0 + $0x520] sm:$0xff]
  %v179 = vld [vmem:[%s0 + $0x528] sm:$0xff]
  %v180 = vld [vmem:[%s0 + $0x530] sm:$0xff]
  %v181 = vld [vmem:[%s0 + $0x538] sm:$0xff]
  %v182 = vld [vmem:[%s0 + $0x540] sm:$0xff]
  %v183 = vld [vmem:[%s0 + $0x548] sm:$0xff]
  %v184 = vld [vmem:[%s0 + $0x550] sm:$0xff]
  %v185 = vld [vmem:[%s0 + $0x558] sm:$0xff]
  %v186 = vld [vmem:[%s0 + $0x560] sm:$0xff]
  %v187 = vld [vmem:[%s0 + $0x568] sm:$0xff]
  %v188 = vld [vmem:[%s0 + $0x570] sm:$0xff]
  %v189 = vld [vmem:[%s0 + $0x578] sm:$0xff]
  %v190 = vld [vmem:[%s0 + $0x580] sm:$0xff]
  %v191 = vld [vmem:[%s0 + $0x588] sm:$0xff]
  %v192 = vld [vmem:[%s0 + $0x590] sm:$0xff]
  %v193 = vld [vmem:[%s0 + $0x598] sm:$0xff]
  %v194 = vld [vmem:[%s0 + $0x5a0] sm:$0xff]
  %v195 = vld [vmem:[%s0 + $0x5a8] sm:$0xff]
  %v196 = vld [vmem:[%s0 + $0x5b0] sm:$0xff]
  %v197 = vld [vmem:[%s0 + $0x5b8] sm:$0xff]
  %v198 = vld [vmem:[%s0 + $0x5c0] sm:$0xff]
  %v199 = vld [vmem:[%s0 + $0x5c8] sm:$0xff]
  %v200 = vld [vmem:[%s0 + $0x5d0] sm:$0xff]
  %v201 = vld [vmem:[%s0 + $0x5d8] sm:$0xff]
  %v202 = vld [vmem:[%s0 + $0x5e0] sm:$0xff]
  %v203 = vld [vmem:[%s0 + $0x5e8] sm:$0xff]
  %v204 = vld [vmem:[%s0 + $0x5f0] sm:$0xff]
  %v205 = vld [vmem:[%s0 + $0x5f8] sm:$0xff]
  %v206 = vld [vmem:[%s0 + $0x600] sm:$0xff]
  %v207 = vld [vmem:[%s0 + $0x608] sm:$0xff]
  %v208 = vld [vmem:[%s0 + $0x610] sm:$0xff]
  %v209 = vld [vmem:[%s0 + $0x618] sm:$0xff]
  %v210 = vld [vmem:[%s0 + $0x620] sm:$0xff]
  %v211 = vld [vmem:[%s0 + $0x628] sm:$0xff]
  %v212 = vld [vmem:[%s0 + $0x630] sm:$0xff]
  %v213 = vld [vmem:[%s0 + $0x638] sm:$0xff]
  %v214 = vld [vmem:[%s0 + $0x640] sm:$0xff]
  %v215 = vld [vmem:[%s0 + $0x648] sm:$0xff]
  %v216 = vld [vmem:[%s0 + $0x650] sm:$0xff]
  %v217 = vld [vmem:[%s0 + $0x658] sm:$0xff]
  %v218 = vld [vmem:[%s0 + $0x660] sm:$0xff]
  %v219 = vld [vmem:[%s0 + $0x668] sm:$0xff]
  %v220 = vld [vmem:[%s0 + $0x670] sm:$0xff]
  %v221 = vld [vmem:[%s0 + $0x678] sm:$0xff]
  %v222 = vld [vmem:[%s0 + $0x680] sm:$0xff]
  %v223 = vld [vmem:[%s0 + $0x688] sm:$0xff]
  %v224 = vld [vmem:[%s0 + $0x690] sm:$0xff]
  %v225 = vld [vmem:[%s0 + $0x698] sm:$0xff]
  %v226 = vld [vmem:[%s0 + $0x6a0] sm:$0xff]
  %v227 = vld [vmem:[%s0 + $0x6a8] sm:$0xff]
  %v228 = vld [vmem:[%s0 + $0x6b0] sm:$0xff]
  %v229 = vld [vmem:[%s0 + $0x6b8] sm:$0xff]
  %v230 = vld [vmem:[%s0 + $0x6c0] sm:$0xff]
  %v231 = vld [vmem:[%s0 + $0x6c8] sm:$0xff]
  %v232 = vld [vmem:[%s0 + $0x6d0] sm:$0xff]
  %v233 = vld [vmem:[%s0 + $0x6d8] sm:$0xff]
  %v234 = vld [vmem:[%s0 + $0x6e0] sm:$0xff]
  %v235 = vld [vmem:[%s0 + $0x6e8] sm:$0xff]
  %v236 = vld [vmem:[%s0 + $0x6f0] sm:$0xff]
  %v237 = vld [vmem:[%s0 + $0x6f8] sm:$0xff]
  %v238 = vld [vmem:[%s0 + $0x700] sm:$0xff]
  %v239 = vld [vmem:[%s0 + $0x708] sm:$0xff]
  %v240 = vld [vmem:[%s0 + $0x710] sm:$0xff]
  %v241 = vld [vmem:[%s0 + $0x718] sm:$0xff]
  %v242 = vld [vmem:[%s0 + $0x720] sm:$0xff]
  %v243 = vld [vmem:[%s0 + $0x728] sm:$0xff]
  %v244 = vld [vmem:[%s0 + $0x730] sm:$0xff]
  %v245 = vld [vmem:[%s0 + $0x738] sm:$0xff]
  %v246 = vld [vmem:[%s0 + $0x740] sm:$0xff]
  %v247 = vld [vmem:[%s0 + $0x748] sm:$0xff]
  %v248 = vld [vmem:[%s0 + $0x750] sm:$0xff]
  %v249 = vld [vmem:[%s0 + $0x758] sm:$0xff]
  %v250 = vld [vmem:[%s0 + $0x760] sm:$0xff]
  %v251 = vld [vmem:[%s0 + $0x768] sm:$0xff]
  %v252 = vld [vmem:[%s0 + $0x770] sm:$0xff]
  %v253 = vld [vmem:[%s0 + $0x778] sm:$0xff]
  %v254 = vld [vmem:[%s0 + $0x780] sm:$0xff]
  %v255 = vld [vmem:[%s0 + $0x788] sm:$0xff]
  %v256 = vld [vmem:[%s0 + $0x790] sm:$0xff]
  %v257 = vld [vmem:[%s0 + $0x798] sm:$0xff]
  %v258 = vld [vmem:[%s0 + $0x7a0] sm:$0xff]
  %v259 = vld [vmem:[%s0 + $0x7a8] sm:$0xff]
  %v260 = vld [vmem:[%s0 + $0x7b0] sm:$0xff]
  %v261 = vld [vmem:[%s0 + $0x7b8] sm:$0xff]
  %v262 = vld [vmem:[%s0 + $0x7c0] sm:$0xff]
  %v263 = vld [vmem:[%s0 + $0x7c8] sm:$0xff]
  %v264 = vld [vmem:[%s0 + $0x7d0] sm:$0xff]
  %v265 = vld [vmem:[%s0 + $0x7d8] sm:$0xff]
  %v266 = vld [vmem:[%s0 + $0x7e0] sm:$0xff]
  %v267 = vld [vmem:[%s0 + $0x7e8] sm:$0xff]
  %v268 = vld [vmem:[%s0 + $0x7f0] sm:$0xff]
  %v269 = vld [vmem:[%s0 + $0x7f8] sm:$0xff]
  %v270 = vld [vmem:[%s0 + $0x800] sm:$0xff]
  %v271 = vld [vmem:[%s0 + $0x808] sm:$0xff]
  %v272 = vld [vmem:[%s0 + $0x810] sm:$0xff]
  %v273 = vld [vmem:[%s0 + $0x818] sm:$0xff]
  %v274 = vld [vmem:[%s0 + $0x820] sm:$0xff]
  %v275 = vld [vmem:[%s0 + $0x828] sm:$0xff]
  %v276 = vld [vmem:[%s0 + $0x830] sm:$0xff]
  %v277 = vld [vmem:[%s0 + $0x838] sm:$0xff]
  %v278 = vld [vmem:[%s0 + $0x840] sm:$0xff]
  %v279 = vld [vmem:[%s0 + $0x848] sm:$0xff]
  %v280 = vld [vmem:[%s0 + $0x850] sm:$0xff]
  %v281 = vld [vmem:[%s0 + $0x858] sm:$0xff]
  %v282 = vld [vmem:[%s0 + $0x860] sm:$0xff]
  %v283 = vld [vmem:[%s0 + $0x868] sm:$0xff]
  %v284 = vld [vmem:[%s0 + $0x870] sm:$0xff]
  %v285 = vld [vmem:[%s0 + $0x878] sm:$0xff]
  %v286 = vld [vmem:[%s0 + $0x880] sm:$0xff]
  %v287 = vld [vmem:[%s0 + $0x888] sm:$0xff]
  %v288 = vld [vmem:[%s0 + $0x890] sm:$0xff]
  %v289 = vld [vmem:[%s0 + $0x898] sm:$0xff]
  %v290 = vld [vmem:[%s0 + $0x8a0] sm:$0xff]
  %v291 = vld [vmem:[%s0 + $0x8a8] sm:$0xff]
  %v292 = vld [vmem:[%s0 + $0x8b0] sm:$0xff]
  %v293 = vld [vmem:[%s0 + $0x8b8] sm:$0xff]
  %v294 = vld [vmem:[%s0 + $0x8c0] sm:$0xff]
  %v295 = vld [vmem:[%s0 + $0x8c8] sm:$0xff]
  %v296 = vld [vmem:[%s0 + $0x8d0] sm:$0xff]
  %v297 = vld [vmem:[%s0 + $0x8d8] sm:$0xff]
  %v298 = vld [vmem:[%s0 + $0x8e0] sm:$0xff]
  %v299 = vld [vmem:[%s0 + $0x8e8] sm:$0xff]
  %v300 = vld [vmem:[%s0 + $0x8f0] sm:$0xff]
  %v301 = vld [vmem:[%s0 + $0x8f8] sm:$0xff]
  %v302 = vld [vmem:[%s0 + $0x900] sm:$0xff]
  %v303 = vld [vmem:[%s0 + $0x908] sm:$0xff]
  %v304 = vld [vmem:[%s0 + $0x910] sm:$0xff]
  %v305 = vld [vmem:[%s0 + $0x918] sm:$0xff]
  %v306 = vld [vmem:[%s0 + $0x920] sm:$0xff]
  %v307 = vld [vmem:[%s0 + $0x928] sm:$0xff]
  %v308 = vld [vmem:[%s0 + $0x930] sm:$0xff]
  %v309 = vld [vmem:[%s0 + $0x938] sm:$0xff]
  %v310 = vld [vmem:[%s0 + $0x940] sm:$0xff]
  %v311 = vld [vmem:[%s0 + $0x948] sm:$0xff]
  %v312 = vld [vmem:[%s0 + $0x950] sm:$0xff]
  %v313 = vld [vmem:[%s0 + $0x958] sm:$0xff]
  %v314 = vld [vmem:[%s1] sm:$0xff]
  %v315 = vld [vmem:[%s1 + $0x8] sm:$0xff]
  %v316 = vld [vmem:[%s1 + $0x10] sm:$0xff]
  %v317 = vld [vmem:[%s1 + $0x18] sm:$0xff]
  %v318 = vld [vmem:[%s1 + $0x20] sm:$0xff]
  %v319 = vld [vmem:[%s1 + $0x28] sm:$0xff]
  %v320 = vld [vmem:[%s1 + $0x30] sm:$0xff]
  %v321 = vld [vmem:[%s1 + $0x38] sm:$0xff]
  %v322 = vld [vmem:[%s1 + $0x40] sm:$0xff]
  %v323 = vld [vmem:[%s1 + $0x48] sm:$0xff]
  %v324 = vld [vmem:[%s1 + $0x50] sm:$0xff]
  %v325 = vld [vmem:[%s1 + $0x58] sm:$0xff]
  %v326 = vld [vmem:[%s1 + $0x60] sm:$0xff]
  %v327 = vld [vmem:[%s1 + $0x68] sm:$0xff]
  %v328 = vld [vmem:[%s1 + $0x70] sm:$0xff]
  %v329 = vld [vmem:[%s1 + $0x78] sm:$0xff]
  %v330 = vld [vmem:[%s1 + $0x80] sm:$0xff]
  %v331 = vld [vmem:[%s1 + $0x88] sm:$0xff]
  %v332 = vld [vmem:[%s1 + $0x90] sm:$0xff]
  %v333 = vld [vmem:[%s1 + $0x98] sm:$0xff]
  %v334 = vld [vmem:[%s1 + $0xa0] sm:$0xff]
  %v335 = vld [vmem:[%s1 + $0xa8] sm:$0xff]
  %v336 = vld [vmem:[%s1 + $0xb0] sm:$0xff]
  %v337 = vld [vmem:[%s1 + $0xb8] sm:$0xff]
  %v338 = vld [vmem:[%s1 + $0xc0] sm:$0xff]
  %v339 = vld [vmem:[%s1 + $0xc8] sm:$0xff]
  %v340 = vld [vmem:[%s1 + $0xd0] sm:$0xff]
  %v341 = vld [vmem:[%s1 + $0xd8] sm:$0xff]
  %v342 = vld [vmem:[%s1 + $0xe0] sm:$0xff]
  %v343 = vld [vmem:[%s1 + $0xe8] sm:$0xff]
  %v344 = vld [vmem:[%s1 + $0xf0] sm:$0xff]
  %v345 = vld [vmem:[%s1 + $0xf8] sm:$0xff]
  %v346 = vld [vmem:[%s1 + $0x100] sm:$0xff]
  %v347 = vld [vmem:[%s1 + $0x108] sm:$0xff]
  %v348 = vld [vmem:[%s1 + $0x110] sm:$0xff]
  %v349 = vld [vmem:[%s1 + $0x118] sm:$0xff]
  %v350 = vld [vmem:[%s1 + $0x120] sm:$0xff]
  %v351 = vld [vmem:[%s1 + $0x128] sm:$0xff]
  %v352 = vld [vmem:[%s1 + $0x130] sm:$0xff]
  %v353 = vld [vmem:[%s1 + $0x138] sm:$0xff]
  %v354 = vld [vmem:[%s1 + $0x140] sm:$0xff]
  %v355 = vld [vmem:[%s1 + $0x148] sm:$0xff]
  %v356 = vld [vmem:[%s1 + $0x150] sm:$0xff]
  %v357 = vld [vmem:[%s1 + $0x158] sm:$0xff]
  %v358 = vld [vmem:[%s1 + $0x160] sm:$0xff]
  %v359 = vld [vmem:[%s1 + $0x168] sm:$0xff]
  %v360 = vld [vmem:[%s1 + $0x170] sm:$0xff]
  %v361 = vld [vmem:[%s1 + $0x178] sm:$0xff]
  %v362 = vld [vmem:[%s1 + $0x180] sm:$0xff]
  %v363 = vld [vmem:[%s1 + $0x188] sm:$0xff]
  %v364 = vld [vmem:[%s1 + $0x190] sm:$0xff]
  %v365 = vld [vmem:[%s1 + $0x198] sm:$0xff]
  %v366 = vld [vmem:[%s1 + $0x1a0] sm:$0xff]
  %v367 = vld [vmem:[%s1 + $0x1a8] sm:$0xff]
  %v368 = vld [vmem:[%s1 + $0x1b0] sm:$0xff]
  %v369 = vld [vmem:[%s1 + $0x1b8] sm:$0xff]
  %v370 = vld [vmem:[%s1 + $0x1c0] sm:$0xff]
  %v371 = vld [vmem:[%s1 + $0x1c8] sm:$0xff]
  %v372 = vld [vmem:[%s1 + $0x1d0] sm:$0xff]
  %v373 = vld [vmem:[%s1 + $0x1d8] sm:$0xff]
  %v374 = vld [vmem:[%s1 + $0x1e0] sm:$0x3]
  %v375 = vld [vmem:[%s1 + $0x1e8] sm:$0x3]
  %v376 = vld [vmem:[%s1 + $0x1f0] sm:$0x3]
  %v377 = vld [vmem:[%s1 + $0x1f8] sm:$0x3]
  %v378 = vld [vmem:[%s1 + $0x200] sm:$0x3]
  %v379 = vld [vmem:[%s1 + $0x208] sm:$0x3]
  %v380 = vld [vmem:[%s1 + $0x210] sm:$0x3]
  %v381 = vld [vmem:[%s1 + $0x218] sm:$0x3]
  %v382 = vld [vmem:[%s1 + $0x220] sm:$0x3]
  %v383 = vld [vmem:[%s1 + $0x228] sm:$0x3]
  %vm384 = vcmask 392192
  %v386 = vsel %vm384, %v323, 0
  %v389 = vsel %vm384, %v333, 0
  %v392 = vsel %vm384, %v343, 0
  %v395 = vsel %vm384, %v353, 0
  %v398 = vsel %vm384, %v363, 0
  %v401 = vsel %vm384, %v373, 0
  %v404 = vsel %vm384, %v383, 0
  %406 = vmatprep.subr.mxu0 %v15
  %407 = vmatpush1.msra.mxu0 %v14
  %408 = vmatprep.subr.mxu0 %v17
  %409 = vmatpush1.msra.mxu0 %v16
  %410 = vmatprep.subr.mxu0 %v19
  %411 = vmatpush1.msra.mxu0 %v18
  %412 = vmatprep.subr.mxu0 %v21
  %413 = vmatpush1.msra.mxu0 %v20
  %414 = vmatprep.subr.mxu0 %v23
  %415 = vmatpush1.msra.mxu0 %v22
  %416 = vmatprep.subr.mxu0 %v25
  %417 = vmatpush1.msra.mxu0 %v24
  %418 = vmatprep.subr.mxu0 %v27
  %419 = vmatpush1.msra.mxu0 %v26
  %420 = vmatprep.subr.mxu0 %v29
  %421 = vmatpush1.msra.mxu0 %v28
  %422 = vmatprep.subr.mxu0 %v31
  %423 = vmatpush1.msra.mxu0 %v30
  %424 = vmatprep.subr.mxu0 %v33
  %425 = vmatpush1.msra.mxu0 %v32
  %426 = vmatprep.subr.mxu0 %v35
  %427 = vmatpush1.msra.mxu0 %v34
  %428 = vmatprep.subr.mxu0 %v37
  %429 = vmatpush1.msra.mxu0 %v36
  %430 = vmatprep.subr.mxu0 %v39
  %431 = vmatpush1.msra.mxu0 %v38
  %432 = vmatprep.subr.mxu0 %v41
  %433 = vmatpush1.msra.mxu0 %v40
  %434 = vmatprep.subr.mxu0 %v43
  %435 = vmatpush1.msra.mxu0 %v42
  %436 = vmatprep.subr.mxu0 %v45
  %437 = vmatpush1.msra.mxu0 %v44
  %438 = vmatprep.subr.mxu0 %v47
  %439 = vmatpush1.msra.mxu0 %v46
  %440 = vmatprep.subr.mxu0 %v49
  %441 = vmatpush1.msra.mxu0 %v48
  %442 = vmatprep.subr.mxu0 %v51
  %443 = vmatpush1.msra.mxu0 %v50
  %444 = vmatprep.subr.mxu0 %v53
  %445 = vmatpush1.msra.mxu0 %v52
  %446 = vmatprep.subr.mxu0 %v55
  %447 = vmatpush1.msra.mxu0 %v54
  %448 = vmatprep.subr.mxu0 %v57
  %449 = vmatpush1.msra.mxu0 %v56
  %450 = vmatprep.subr.mxu0 %v59
  %451 = vmatpush1.msra.mxu0 %v58
  %452 = vmatprep.subr.mxu0 %v61
  %453 = vmatpush1.msra.mxu0 %v60
  %454 = vmatprep.subr.mxu0 %v63
  %455 = vmatpush1.msra.mxu0 %v62
  %456 = vmatprep.subr.mxu0 %v65
  %457 = vmatpush1.msra.mxu0 %v64
  %458 = vmatprep.subr.mxu0 %v67
  %459 = vmatpush1.msra.mxu0 %v66
  %460 = vmatprep.subr.mxu0 %v69
  %461 = vmatpush1.msra.mxu0 %v68
  %462 = vmatprep.subr.mxu0 %v71
  %463 = vmatpush1.msra.mxu0 %v70
  %464 = vmatprep.subr.mxu0 %v73
  %465 = vmatpush1.msra.mxu0 %v72
  %466 = vmatprep.subr.mxu0 %v75
  %467 = vmatpush1.msra.mxu0 %v74
  %468 = vmatprep.subr.mxu0 %v77
  %469 = vmatpush1.msra.mxu0 %v76
  %470 = vmatprep.mubr.f32.mxu0 %v315
  %471 = vmatmul.mubr.f32.gmra.mrb[0].mxu0 %v314
  %v472 = vpop.f32.mrb[0].mxu0
  %v473 = vadd.f32 0.0, %v472
  %v474 = vpop.f32.mrb[0].mxu0
  %v475 = vadd.f32 0.0, %v474
  %476 = vmatprep.mubr.f32.mxu0 %v325
  %477 = vmatmul.mubr.f32.gmra.mrb[0].mxu0 %v324
  %v478 = vpop.f32.mrb[0].mxu0
  %v479 = vadd.f32 0.0, %v478
  %v480 = vpop.f32.mrb[0].mxu0
  %v481 = vadd.f32 0.0, %v480
  %482 = vmatprep.mubr.f32.mxu0 %v335
  %483 = vmatmul.mubr.f32.gmra.mrb[0].mxu0 %v334
  %v484 = vpop.f32.mrb[0].mxu0
  %v485 = vadd.f32 0.0, %v484
  %v486 = vpop.f32.mrb[0].mxu0
  %v487 = vadd.f32 0.0, %v486
  %488 = vmatprep.mubr.f32.mxu0 %v345
  %489 = vmatmul.mubr.f32.gmra.mrb[0].mxu0 %v344
  %v490 = vpop.f32.mrb[0].mxu0
  %v491 = vadd.f32 0.0, %v490
  %v492 = vpop.f32.mrb[0].mxu0
  %v493 = vadd.f32 0.0, %v492
  %494 = vmatprep.mubr.f32.mxu0 %v355
  %495 = vmatmul.mubr.f32.gmra.mrb[0].mxu0 %v354
  %v496 = vpop.f32.mrb[0].mxu0
  %v497 = vadd.f32 0.0, %v496
  %v498 = vpop.f32.mrb[0].mxu0
  %v499 = vadd.f32 0.0, %v498
  %500 = vmatprep.mubr.f32.mxu0 %v365
  %501 = vmatmul.mubr.f32.gmra.mrb[0].mxu0 %v364
  %v502 = vpop.f32.mrb[0].mxu0
  %v503 = vadd.f32 0.0, %v502
  %v504 = vpop.f32.mrb[0].mxu0
  %v505 = vadd.f32 0.0, %v504
  %506 = vmatprep.mubr.f32.mxu0 %v375
  %507 = vmatmul.mubr.f32.gmra.mrb[0].mxu0 %v374
  %v508 = vpop.f32.mrb[0].mxu0
  %v509 = vadd.f32 0.0, %v508
  %v510 = vpop.f32.mrb[0].mxu0
  %v511 = vadd.f32 0.0, %v510
  %512 = vdwg.mxu0
  %513 = vmatprep.subr.mxu0 %v79
  %514 = vmatpush1.msra.mxu0 %v78
  %515 = vmatprep.subr.mxu0 %v81
  %516 = vmatpush1.msra.mxu0 %v80
  %517 = vmatprep.subr.mxu0 %v83
  %518 = vmatpush1.msra.mxu0 %v82
  %519 = vmatprep.subr.mxu0 %v85
  %520 = vmatpush1.msra.mxu0 %v84
  %521 = vmatprep.subr.mxu0 %v87
  %522 = vmatpush1.msra.mxu0 %v86
  %523 = vmatprep.subr.mxu0 %v89
  %524 = vmatpush1.msra.mxu0 %v88
  %525 = vmatprep.subr.mxu0 %v91
  %526 = vmatpush1.msra.mxu0 %v90
  %527 = vmatprep.subr.mxu0 %v93
  %528 = vmatpush1.msra.mxu0 %v92
  %529 = vmatprep.subr.mxu0 %v95
  %530 = vmatpush1.msra.mxu0 %v94
  %531 = vmatprep.subr.mxu0 %v97
  %532 = vmatpush1.msra.mxu0 %v96
  %533 = vmatprep.subr.mxu0 %v99
  %534 = vmatpush1.msra.mxu0 %v98
  %535 = vmatprep.subr.mxu0 %v101
  %536 = vmatpush1.msra.mxu0 %v100
  %537 = vmatprep.subr.mxu0 %v103
  %538 = vmatpush1.msra.mxu0 %v102
  %539 = vmatprep.subr.mxu0 %v105
  %540 = vmatpush1.msra.mxu0 %v104
  %541 = vmatprep.subr.mxu0 %v107
  %542 = vmatpush1.msra.mxu0 %v106
  %543 = vmatprep.subr.mxu0 %v109
  %544 = vmatpush1.msra.mxu0 %v108
  %545 = vmatprep.subr.mxu0 %v111
  %546 = vmatpush1.msra.mxu0 %v110
  %547 = vmatprep.subr.mxu0 %v113
  %548 = vmatpush1.msra.mxu0 %v112
  %549 = vmatprep.subr.mxu0 %v115
  %550 = vmatpush1.msra.mxu0 %v114
  %551 = vmatprep.subr.mxu0 %v117
  %552 = vmatpush1.msra.mxu0 %v116
  %553 = vmatprep.subr.mxu0 %v119
  %554 = vmatpush1.msra.mxu0 %v118
  %555 = vmatprep.subr.mxu0 %v121
  %556 = vmatpush1.msra.mxu0 %v120
  %557 = vmatprep.subr.mxu0 %v123
  %558 = vmatpush1.msra.mxu0 %v122
  %559 = vmatprep.subr.mxu0 %v125
  %560 = vmatpush1.msra.mxu0 %v124
  %561 = vmatprep.subr.mxu0 %v127
  %562 = vmatpush1.msra.mxu0 %v126
  %563 = vmatprep.subr.mxu0 %v129
  %564 = vmatpush1.msra.mxu0 %v128
  %565 = vmatprep.subr.mxu0 %v131
  %566 = vmatpush1.msra.mxu0 %v130
  %567 = vmatprep.subr.mxu0 %v133
  %568 = vmatpush1.msra.mxu0 %v132
  %569 = vmatprep.subr.mxu0 %v135
  %570 = vmatpush1.msra.mxu0 %v134
  %571 = vmatprep.subr.mxu0 %v137
  %572 = vmatpush1.msra.mxu0 %v136
  %573 = vmatprep.subr.mxu0 %v139
  %574 = vmatpush1.msra.mxu0 %v138
  %575 = vmatprep.subr.mxu0 %v141
  %576 = vmatpush1.msra.mxu0 %v140
  %577 = vmatprep.mubr.f32.mxu0 %v317
  %578 = vmatmul.mubr.f32.gmra.mrb[0].mxu0 %v316
  %v579 = vpop.f32.mrb[0].mxu0
  %v580 = vadd.f32 %v473, %v579
  %v581 = vpop.f32.mrb[0].mxu0
  %v582 = vadd.f32 %v475, %v581
  %583 = vmatprep.mubr.f32.mxu0 %v327
  %584 = vmatmul.mubr.f32.gmra.mrb[0].mxu0 %v326
  %v585 = vpop.f32.mrb[0].mxu0
  %v586 = vadd.f32 %v479, %v585
  %v587 = vpop.f32.mrb[0].mxu0
  %v588 = vadd.f32 %v481, %v587
  %589 = vmatprep.mubr.f32.mxu0 %v337
  %590 = vmatmul.mubr.f32.gmra.mrb[0].mxu0 %v336
  %v591 = vpop.f32.mrb[0].mxu0
  %v592 = vadd.f32 %v485, %v591
  %v593 = vpop.f32.mrb[0].mxu0
  %v594 = vadd.f32 %v487, %v593
  %595 = vmatprep.mubr.f32.mxu0 %v347
  %596 = vmatmul.mubr.f32.gmra.mrb[0].mxu0 %v346
  %v597 = vpop.f32.mrb[0].mxu0
  %v598 = vadd.f32 %v491, %v597
  %v599 = vpop.f32.mrb[0].mxu0
  %v600 = vadd.f32 %v493, %v599
  %601 = vmatprep.mubr.f32.mxu0 %v357
  %602 = vmatmul.mubr.f32.gmra.mrb[0].mxu0 %v356
  %v603 = vpop.f32.mrb[0].mxu0
  %v604 = vadd.f32 %v497, %v603
  %v605 = vpop.f32.mrb[0].mxu0
  %v606 = vadd.f32 %v499, %v605
  %607 = vmatprep.mubr.f32.mxu0 %v367
  %608 = vmatmul.mubr.f32.gmra.mrb[0].mxu0 %v366
  %v609 = vpop.f32.mrb[0].mxu0
  %v610 = vadd.f32 %v503, %v609
  %v611 = vpop.f32.mrb[0].mxu0
  %v612 = vadd.f32 %v505, %v611
  %613 = vmatprep.mubr.f32.mxu0 %v377
  %614 = vmatmul.mubr.f32.gmra.mrb[0].mxu0 %v376
  %v615 = vpop.f32.mrb[0].mxu0
  %v616 = vadd.f32 %v509, %v615
  %v617 = vpop.f32.mrb[0].mxu0
  %v618 = vadd.f32 %v511, %v617
  %619 = vdwg.mxu0
  %620 = vmatprep.subr.mxu0 %v143
  %621 = vmatpush1.msra.mxu0 %v142
  %622 = vmatprep.subr.mxu0 %v145
  %623 = vmatpush1.msra.mxu0 %v144
  %624 = vmatprep.subr.mxu0 %v147
  %625 = vmatpush1.msra.mxu0 %v146
  %626 = vmatprep.subr.mxu0 %v149
  %627 = vmatpush1.msra.mxu0 %v148
  %628 = vmatprep.subr.mxu0 %v151
  %629 = vmatpush1.msra.mxu0 %v150
  %630 = vmatprep.subr.mxu0 %v153
  %631 = vmatpush1.msra.mxu0 %v152
  %632 = vmatprep.subr.mxu0 %v155
  %633 = vmatpush1.msra.mxu0 %v154
  %634 = vmatprep.subr.mxu0 %v157
  %635 = vmatpush1.msra.mxu0 %v156
  %636 = vmatprep.subr.mxu0 %v159
  %637 = vmatpush1.msra.mxu0 %v158
  %638 = vmatprep.subr.mxu0 %v161
  %639 = vmatpush1.msra.mxu0 %v160
  %640 = vmatprep.subr.mxu0 %v163
  %641 = vmatpush1.msra.mxu0 %v162
  %642 = vmatprep.subr.mxu0 %v165
  %643 = vmatpush1.msra.mxu0 %v164
  %644 = vmatprep.subr.mxu0 %v167
  %645 = vmatpush1.msra.mxu0 %v166
  %646 = vmatprep.subr.mxu0 %v169
  %647 = vmatpush1.msra.mxu0 %v168
  %648 = vmatprep.subr.mxu0 %v171
  %649 = vmatpush1.msra.mxu0 %v170
  %650 = vmatprep.subr.mxu0 %v173
  %651 = vmatpush1.msra.mxu0 %v172
  %652 = vmatprep.subr.mxu0 %v175
  %653 = vmatpush1.msra.mxu0 %v174
  %654 = vmatprep.subr.mxu0 %v177
  %655 = vmatpush1.msra.mxu0 %v176
  %656 = vmatprep.subr.mxu0 %v179
  %657 = vmatpush1.msra.mxu0 %v178
  %658 = vmatprep.subr.mxu0 %v181
  %659 = vmatpush1.msra.mxu0 %v180
  %660 = vmatprep.subr.mxu0 %v183
  %661 = vmatpush1.msra.mxu0 %v182
  %662 = vmatprep.subr.mxu0 %v185
  %663 = vmatpush1.msra.mxu0 %v184
  %664 = vmatprep.subr.mxu0 %v187
  %665 = vmatpush1.msra.mxu0 %v186
  %666 = vmatprep.subr.mxu0 %v189
  %667 = vmatpush1.msra.mxu0 %v188
  %668 = vmatprep.subr.mxu0 %v191
  %669 = vmatpush1.msra.mxu0 %v190
  %670 = vmatprep.subr.mxu0 %v193
  %671 = vmatpush1.msra.mxu0 %v192
  %672 = vmatprep.subr.mxu0 %v195
  %673 = vmatpush1.msra.mxu0 %v194
  %674 = vmatprep.subr.mxu0 %v197
  %675 = vmatpush1.msra.mxu0 %v196
  %676 = vmatprep.subr.mxu0 %v199
  %677 = vmatpush1.msra.mxu0 %v198
  %678 = vmatprep.subr.mxu0 %v201
  %679 = vmatpush1.msra.mxu0 %v200
  %680 = vmatprep.subr.mxu0 %v203
  %681 = vmatpush1.msra.mxu0 %v202
  %682 = vmatprep.subr.mxu0 %v205
  %683 = vmatpush1.msra.mxu0 %v204
  %684 = vmatprep.mubr.f32.mxu0 %v319
  %685 = vmatmul.mubr.f32.gmra.mrb[0].mxu0 %v318
  %v686 = vpop.f32.mrb[0].mxu0
  %v687 = vadd.f32 %v580, %v686
  %v688 = vpop.f32.mrb[0].mxu0
  %v689 = vadd.f32 %v582, %v688
  %690 = vmatprep.mubr.f32.mxu0 %v329
  %691 = vmatmul.mubr.f32.gmra.mrb[0].mxu0 %v328
  %v692 = vpop.f32.mrb[0].mxu0
  %v693 = vadd.f32 %v586, %v692
  %v694 = vpop.f32.mrb[0].mxu0
  %v695 = vadd.f32 %v588, %v694
  %696 = vmatprep.mubr.f32.mxu0 %v339
  %697 = vmatmul.mubr.f32.gmra.mrb[0].mxu0 %v338
  %v698 = vpop.f32.mrb[0].mxu0
  %v699 = vadd.f32 %v592, %v698
  %v700 = vpop.f32.mrb[0].mxu0
  %v701 = vadd.f32 %v594, %v700
  %702 = vmatprep.mubr.f32.mxu0 %v349
  %703 = vmatmul.mubr.f32.gmra.mrb[0].mxu0 %v348
  %v704 = vpop.f32.mrb[0].mxu0
  %v705 = vadd.f32 %v598, %v704
  %v706 = vpop.f32.mrb[0].mxu0
  %v707 = vadd.f32 %v600, %v706
  %708 = vmatprep.mubr.f32.mxu0 %v359
  %709 = vmatmul.mubr.f32.gmra.mrb[0].mxu0 %v358
  %v710 = vpop.f32.mrb[0].mxu0
  %v711 = vadd.f32 %v604, %v710
  %v712 = vpop.f32.mrb[0].mxu0
  %v713 = vadd.f32 %v606, %v712
  %714 = vmatprep.mubr.f32.mxu0 %v369
  %715 = vmatmul.mubr.f32.gmra.mrb[0].mxu0 %v368
  %v716 = vpop.f32.mrb[0].mxu0
  %v717 = vadd.f32 %v610, %v716
  %v718 = vpop.f32.mrb[0].mxu0
  %v719 = vadd.f32 %v612, %v718
  %720 = vmatprep.mubr.f32.mxu0 %v379
  %721 = vmatmul.mubr.f32.gmra.mrb[0].mxu0 %v378
  %v722 = vpop.f32.mrb[0].mxu0
  %v723 = vadd.f32 %v616, %v722
  %v724 = vpop.f32.mrb[0].mxu0
  %v725 = vadd.f32 %v618, %v724
  %726 = vdwg.mxu0
  %727 = vmatprep.subr.mxu0 %v207
  %728 = vmatpush1.msra.mxu0 %v206
  %729 = vmatprep.subr.mxu0 %v209
  %730 = vmatpush1.msra.mxu0 %v208
  %731 = vmatprep.subr.mxu0 %v211
  %732 = vmatpush1.msra.mxu0 %v210
  %733 = vmatprep.subr.mxu0 %v213
  %734 = vmatpush1.msra.mxu0 %v212
  %735 = vmatprep.subr.mxu0 %v215
  %736 = vmatpush1.msra.mxu0 %v214
  %737 = vmatprep.subr.mxu0 %v217
  %738 = vmatpush1.msra.mxu0 %v216
  %739 = vmatprep.subr.mxu0 %v219
  %740 = vmatpush1.msra.mxu0 %v218
  %741 = vmatprep.subr.mxu0 %v221
  %742 = vmatpush1.msra.mxu0 %v220
  %743 = vmatprep.subr.mxu0 %v223
  %744 = vmatpush1.msra.mxu0 %v222
  %745 = vmatprep.subr.mxu0 %v225
  %746 = vmatpush1.msra.mxu0 %v224
  %747 = vmatprep.subr.mxu0 %v227
  %748 = vmatpush1.msra.mxu0 %v226
  %749 = vmatprep.subr.mxu0 %v229
  %750 = vmatpush1.msra.mxu0 %v228
  %751 = vmatprep.subr.mxu0 %v231
  %752 = vmatpush1.msra.mxu0 %v230
  %753 = vmatprep.subr.mxu0 %v233
  %754 = vmatpush1.msra.mxu0 %v232
  %755 = vmatprep.subr.mxu0 %v235
  %756 = vmatpush1.msra.mxu0 %v234
  %757 = vmatprep.subr.mxu0 %v237
  %758 = vmatpush1.msra.mxu0 %v236
  %759 = vmatprep.subr.mxu0 %v239
  %760 = vmatpush1.msra.mxu0 %v238
  %761 = vmatprep.subr.mxu0 %v241
  %762 = vmatpush1.msra.mxu0 %v240
  %763 = vmatprep.subr.mxu0 %v243
  %764 = vmatpush1.msra.mxu0 %v242
  %765 = vmatprep.subr.mxu0 %v245
  %766 = vmatpush1.msra.mxu0 %v244
  %767 = vmatprep.subr.mxu0 %v247
  %768 = vmatpush1.msra.mxu0 %v246
  %769 = vmatprep.subr.mxu0 %v249
  %770 = vmatpush1.msra.mxu0 %v248
  %771 = vmatprep.subr.mxu0 %v251
  %772 = vmatpush1.msra.mxu0 %v250
  %773 = vmatprep.subr.mxu0 %v253
  %774 = vmatpush1.msra.mxu0 %v252
  %775 = vmatprep.subr.mxu0 %v255
  %776 = vmatpush1.msra.mxu0 %v254
  %777 = vmatprep.subr.mxu0 %v257
  %778 = vmatpush1.msra.mxu0 %v256
  %779 = vmatprep.subr.mxu0 %v259
  %780 = vmatpush1.msra.mxu0 %v258
  %781 = vmatprep.subr.mxu0 %v261
  %782 = vmatpush1.msra.mxu0 %v260
  %783 = vmatprep.subr.mxu0 %v263
  %784 = vmatpush1.msra.mxu0 %v262
  %785 = vmatprep.subr.mxu0 %v265
  %786 = vmatpush1.msra.mxu0 %v264
  %787 = vmatprep.subr.mxu0 %v267
  %788 = vmatpush1.msra.mxu0 %v266
  %789 = vmatprep.subr.mxu0 %v269
  %790 = vmatpush1.msra.mxu0 %v268
  %791 = vmatprep.mubr.f32.mxu0 %v321
  %792 = vmatmul.mubr.f32.gmra.mrb[0].mxu0 %v320
  %v793 = vpop.f32.mrb[0].mxu0
  %v794 = vadd.f32 %v687, %v793
  %v795 = vpop.f32.mrb[0].mxu0
  %v796 = vadd.f32 %v689, %v795
  %797 = vmatprep.mubr.f32.mxu0 %v331
  %798 = vmatmul.mubr.f32.gmra.mrb[0].mxu0 %v330
  %v799 = vpop.f32.mrb[0].mxu0
  %v800 = vadd.f32 %v693, %v799
  %v801 = vpop.f32.mrb[0].mxu0
  %v802 = vadd.f32 %v695, %v801
  %803 = vmatprep.mubr.f32.mxu0 %v341
  %804 = vmatmul.mubr.f32.gmra.mrb[0].mxu0 %v340
  %v805 = vpop.f32.mrb[0].mxu0
  %v806 = vadd.f32 %v699, %v805
  %v807 = vpop.f32.mrb[0].mxu0
  %v808 = vadd.f32 %v701, %v807
  %809 = vmatprep.mubr.f32.mxu0 %v351
  %810 = vmatmul.mubr.f32.gmra.mrb[0].mxu0 %v350
  %v811 = vpop.f32.mrb[0].mxu0
  %v812 = vadd.f32 %v705, %v811
  %v813 = vpop.f32.mrb[0].mxu0
  %v814 = vadd.f32 %v707, %v813
  %815 = vmatprep.mubr.f32.mxu0 %v361
  %816 = vmatmul.mubr.f32.gmra.mrb[0].mxu0 %v360
  %v817 = vpop.f32.mrb[0].mxu0
  %v818 = vadd.f32 %v711, %v817
  %v819 = vpop.f32.mrb[0].mxu0
  %v820 = vadd.f32 %v713, %v819
  %821 = vmatprep.mubr.f32.mxu0 %v371
  %822 = vmatmul.mubr.f32.gmra.mrb[0].mxu0 %v370
  %v823 = vpop.f32.mrb[0].mxu0
  %v824 = vadd.f32 %v717, %v823
  %v825 = vpop.f32.mrb[0].mxu0
  %v826 = vadd.f32 %v719, %v825
  %827 = vmatprep.mubr.f32.mxu0 %v381
  %828 = vmatmul.mubr.f32.gmra.mrb[0].mxu0 %v380
  %v829 = vpop.f32.mrb[0].mxu0
  %v830 = vadd.f32 %v723, %v829
  %v831 = vpop.f32.mrb[0].mxu0
  %v832 = vadd.f32 %v725, %v831
  %833 = vdwg.mxu0
  %834 = vmatprep.subr.mxu0 %v271
  %835 = vmatpush1.msra.mxu0 %v270
  %836 = vmatprep.subr.mxu0 %v273
  %837 = vmatpush1.msra.mxu0 %v272
  %838 = vmatprep.subr.mxu0 %v275
  %839 = vmatpush1.msra.mxu0 %v274
  %840 = vmatprep.subr.mxu0 %v277
  %841 = vmatpush1.msra.mxu0 %v276
  %842 = vmatprep.subr.mxu0 %v279
  %843 = vmatpush1.msra.mxu0 %v278
  %844 = vmatprep.subr.mxu0 %v281
  %845 = vmatpush1.msra.mxu0 %v280
  %846 = vmatprep.subr.mxu0 %v283
  %847 = vmatpush1.msra.mxu0 %v282
  %848 = vmatprep.subr.mxu0 %v285
  %849 = vmatpush1.msra.mxu0 %v284
  %850 = vmatprep.subr.mxu0 %v287
  %851 = vmatpush1.msra.mxu0 %v286
  %852 = vmatprep.subr.mxu0 %v289
  %853 = vmatpush1.msra.mxu0 %v288
  %854 = vmatprep.subr.mxu0 %v291
  %855 = vmatpush1.msra.mxu0 %v290
  %856 = vmatprep.subr.mxu0 %v293
  %857 = vmatpush1.msra.mxu0 %v292
  %858 = vmatprep.subr.mxu0 %v295
  %859 = vmatpush1.msra.mxu0 %v294
  %860 = vmatprep.subr.mxu0 %v297
  %861 = vmatpush1.msra.mxu0 %v296
  %862 = vmatprep.subr.mxu0 %v299
  %863 = vmatpush1.msra.mxu0 %v298
  %864 = vmatprep.subr.mxu0 %v301
  %865 = vmatpush1.msra.mxu0 %v300
  %866 = vmatprep.subr.mxu0 %v303
  %867 = vmatpush1.msra.mxu0 %v302
  %868 = vmatprep.subr.mxu0 %v305
  %869 = vmatpush1.msra.mxu0 %v304
  %870 = vmatprep.subr.mxu0 %v307
  %871 = vmatpush1.msra.mxu0 %v306
  %872 = vmatprep.subr.mxu0 %v309
  %873 = vmatpush1.msra.mxu0 %v308
  %874 = vmatprep.subr.mxu0 %v311
  %875 = vmatpush1.msra.mxu0 %v310
  %876 = vmatprep.subr.mxu0 %v313
  %877 = vmatpush1.msra.mxu0 %v312
  %878 = vmatprep.subr.mxu0 0.0
  %879 = vmatpush1.msra.mxu0 0.0
  %880 = vmatprep.subr.mxu0 0.0
  %881 = vmatpush1.msra.mxu0 0.0
  %882 = vmatprep.subr.mxu0 0.0
  %883 = vmatpush1.msra.mxu0 0.0
  %884 = vmatprep.subr.mxu0 0.0
  %885 = vmatpush1.msra.mxu0 0.0
  %886 = vmatprep.subr.mxu0 0.0
  %887 = vmatpush1.msra.mxu0 0.0
  %888 = vmatprep.subr.mxu0 0.0
  %889 = vmatpush1.msra.mxu0 0.0
  %890 = vmatprep.subr.mxu0 0.0
  %891 = vmatpush1.msra.mxu0 0.0
  %892 = vmatprep.subr.mxu0 0.0
  %893 = vmatpush1.msra.mxu0 0.0
  %894 = vmatprep.subr.mxu0 0.0
  %895 = vmatpush1.msra.mxu0 0.0
  %896 = vmatprep.subr.mxu0 0.0
  %897 = vmatpush1.msra.mxu0 0.0
  %898 = vmatprep.mubr.f32.mxu0 %v386
  %899 = vmatmul.mubr.f32.gmra.mrb[0].mxu0 %v322
  %v900 = vpop.f32.mrb[0].mxu0
  %v901 = vadd.f32 %v794, %v900
  %v902 = vpop.f32.mrb[0].mxu0
  %v903 = vadd.f32 %v796, %v902
  %904 = vmatprep.mubr.f32.mxu0 %v389
  %905 = vmatmul.mubr.f32.gmra.mrb[0].mxu0 %v332
  %v906 = vpop.f32.mrb[0].mxu0
  %v907 = vadd.f32 %v800, %v906
  %v908 = vpop.f32.mrb[0].mxu0
  %v909 = vadd.f32 %v802, %v908
  %910 = vmatprep.mubr.f32.mxu0 %v392
  %911 = vmatmul.mubr.f32.gmra.mrb[0].mxu0 %v342
  %v912 = vpop.f32.mrb[0].mxu0
  %v913 = vadd.f32 %v806, %v912
  %v914 = vpop.f32.mrb[0].mxu0
  %v915 = vadd.f32 %v808, %v914
  %916 = vmatprep.mubr.f32.mxu0 %v395
  %917 = vmatmul.mubr.f32.gmra.mrb[0].mxu0 %v352
  %v918 = vpop.f32.mrb[0].mxu0
  %v919 = vadd.f32 %v812, %v918
  %v920 = vpop.f32.mrb[0].mxu0
  %v921 = vadd.f32 %v814, %v920
  %922 = vmatprep.mubr.f32.mxu0 %v398
  %923 = vmatmul.mubr.f32.gmra.mrb[0].mxu0 %v362
  %v924 = vpop.f32.mrb[0].mxu0
  %v925 = vadd.f32 %v818, %v924
  %v926 = vpop.f32.mrb[0].mxu0
  %v927 = vadd.f32 %v820, %v926
  %928 = vmatprep.mubr.f32.mxu0 %v401
  %929 = vmatmul.mubr.f32.gmra.mrb[0].mxu0 %v372
  %v930 = vpop.f32.mrb[0].mxu0
  %v931 = vadd.f32 %v824, %v930
  %v932 = vpop.f32.mrb[0].mxu0
  %v933 = vadd.f32 %v826, %v932
  %934 = vmatprep.mubr.f32.mxu0 %v404
  %935 = vmatmul.mubr.f32.gmra.mrb[0].mxu0 %v382
  %v936 = vpop.f32.mrb[0].mxu0
  %v937 = vadd.f32 %v830, %v936
  %v938 = vpop.f32.mrb[0].mxu0
  %v939 = vadd.f32 %v832, %v938
  %940 = vdwg.mxu0
  %vm941 = vcmask 556032
  %v942 = vsel %vm941, %v903, 0.0
  %v943 = vadd.f32 %v901, %v942
  %944 = vadd.xlane.f32.xlu0 %v943
  %v945 = vpop.xlane.xlu0 %944
  %v946 = vsel %vm941, %v909, 0.0
  %v947 = vadd.f32 %v907, %v946
  %948 = vadd.xlane.f32.xlu0 %v947
  %v949 = vpop.xlane.xlu0 %948
  %v950 = vsel %vm941, %v915, 0.0
  %v951 = vadd.f32 %v913, %v950
  %952 = vadd.xlane.f32.xlu0 %v951
  %v953 = vpop.xlane.xlu0 %952
  %v954 = vsel %vm941, %v921, 0.0
  %v955 = vadd.f32 %v919, %v954
  %956 = vadd.xlane.f32.xlu0 %v955
  %v957 = vpop.xlane.xlu0 %956
  %v958 = vsel %vm941, %v927, 0.0
  %v959 = vadd.f32 %v925, %v958
  %960 = vadd.xlane.f32.xlu0 %v959
  %v961 = vpop.xlane.xlu0 %960
  %v962 = vsel %vm941, %v933, 0.0
  %v963 = vadd.f32 %v931, %v962
  %964 = vadd.xlane.f32.xlu0 %v963
  %v965 = vpop.xlane.xlu0 %964
  %vm966 = vcmask 1041408
  %v967 = vsel %vm966, %v937, 0.0
  %vm968 = vcmask 549888
  %v969 = vsel %vm968, %v939, 0.0
  %v970 = vadd.f32 %v967, %v969
  %971 = vadd.xlane.f32.xlu0 %v970
  %v972 = vpop.xlane.xlu0 %971
  %v973 = vmul.f32 %v945, 0.0051020407
  %v974 = vmul.f32 %v949, 0.0051020407
  %v975 = vmul.f32 %v953, 0.0051020407
  %v976 = vmul.f32 %v957, 0.0051020407
  %v977 = vmul.f32 %v961, 0.0051020407
  %v978 = vmul.f32 %v965, 0.0051020407
  %v979 = vmul.f32 %v972, 0.0051020407
  %v980 = vld [vmem:[%s2] sm:$0xff]
  %v981 = vld [vmem:[%s2 + $0x8] sm:$0xff]
  %v982 = vld [vmem:[%s2 + $0x10] sm:$0xff]
  %v983 = vld [vmem:[%s2 + $0x18] sm:$0xff]
  %v984 = vld [vmem:[%s2 + $0x20] sm:$0xff]
  %v985 = vld [vmem:[%s2 + $0x28] sm:$0xff]
  %v986 = vld [vmem:[%s2 + $0x30] sm:$0x3]
  %v987 = vadd.f32 %v973, %v980
  %v988 = vadd.f32 %v974, %v981
  %v989 = vadd.f32 %v975, %v982
  %v990 = vadd.f32 %v976, %v983
  %v991 = vadd.f32 %v977, %v984
  %v992 = vadd.f32 %v978, %v985
  %v993 = vadd.f32 %v979, %v986
  %vm994 = vcmask 7168
  %995 = vst.msk [vmem:[%s3] sm:$0xff] %vm994, %v987
  %996 = vst.msk [vmem:[%s3 + $0x8] sm:$0xff] %vm994, %v988
  %997 = vst.msk [vmem:[%s3 + $0x10] sm:$0xff] %vm994, %v989
  %998 = vst.msk [vmem:[%s3 + $0x18] sm:$0xff] %vm994, %v990
  %999 = vst.msk [vmem:[%s3 + $0x20] sm:$0xff] %vm994, %v991
  %1000 = vst.msk [vmem:[%s3 + $0x28] sm:$0xff] %vm994, %v992
  %vm1001 = vcmask 1024
  %1002 = vst.msk [vmem:[%s3 + $0x30] sm:$0x3] %vm1001, %v993
  // Predicated region
  $region14: #{tpu_custom_call.1} parent=0 // pred_check
    _
  $region15: #{tpu_custom_call.1} parent=0 // pred_check_branch
    %1004 = sbr.rel (0) target = $region17
  $region16: #{tpu_custom_call.1} parent=0 // pred_region
    _
  $region17: #{tpu_custom_call.1} parent=0 // pred_fallthru
    _
  // Predicated region
  $region18: #{tpu_custom_call.1} parent=0 // pred_check
    _
  $region19: #{tpu_custom_call.1} parent=0 // pred_check_branch
    %1006 = sbr.rel (0) target = $region21
  $region20: #{tpu_custom_call.1} parent=0 // pred_region
    _
  $region21: #{tpu_custom_call.1} parent=0 // pred_fallthru
    _

</llo_original>
